<compile_context>
chip_gen: v5e
topology: v5e:2x2
jax: 0.10.0
libtpu: 0.0.40
codegen_flags: <defaults>
</compile_context>

<pallas_src>
import numpy as np
import jax
import jax.numpy as jnp
from jax import lax
from jax.experimental import pallas as pl
from jax.experimental.pallas import tpu as pltpu

# ----- model hyper-params (small, consistent with the module) -----
B = 2                      # batch
L = 8                      # sequence length
D = 32                     # dim_in
NUM_HEAD = 4
DIM_HEAD = D // NUM_HEAD   # 8
DIM_HIDDEN = 64
EPS = 1e-5                 # nn.LayerNorm default eps

NSTK_B = NUM_HEAD * L      # stacked ("viewed") rows per batch element = 32

# ----- packed-constant column offsets (one (NSTK_B, CONST_W) buffer) -----
OFF_MASK_BIG = 0                                # chunk lane-mask, NUM_HEAD*D cols
OFF_BIAS = OFF_MASK_BIG + NUM_HEAD * D          # 128: block-diag additive bias
OFF_MASK_SML = OFF_BIAS + NSTK_B                # 160: chunk lane-mask, D cols
OFF_RREP = OFF_MASK_SML + D                     # 192: row-replication selector
OFF_RREPT = OFF_RREP + L                        # 200: its transpose (rows 0:L)
CONST_W = OFF_RREPT + NSTK_B                    # 232

# ----- packed-weight offsets (one (DIM_HIDDEN, WMISC_W) buffer) -----
WO_COL = 0                                      # Wo^T   rows[0:D),         cols[0:D)
W1_COL = D                                      # W1^T   rows[0:D),         cols[D:D+H)
W2_COL = D + DIM_HIDDEN                         # W2^T   rows[0:H),         cols[..:..+D)
LN_ROW = D                                      # LN g1/b1/g2/b2 rows[D:D+4), cols[0:D)
WMISC_W = 2 * D + DIM_HIDDEN                    # 128


def _build_consts():
    """Pure-numpy constants (baked once, DMA'd as a single operand)."""
    r = np.arange(NSTK_B)
    chunk = r % NUM_HEAD
    c = np.zeros((NSTK_B, CONST_W), np.float32)
    # chunk lane-mask over NUM_HEAD*D columns (head-split QKV matmul)
    c[:, OFF_MASK_BIG:OFF_MASK_BIG + NUM_HEAD * D] = (
        chunk[:, None] == (np.arange(NUM_HEAD * D)[None, :] // D)
    ).astype(np.float32)
    # additive block-diagonal attention bias (heads = consecutive groups of L rows)
    head = r // L
    c[:, OFF_BIAS:OFF_BIAS + NSTK_B] = np.where(
        head[:, None] == head[None, :], 0.0, -1e30).astype(np.float32)
    # chunk lane-mask over D columns (inverse head view)
    c[:, OFF_MASK_SML:OFF_MASK_SML + D] = (
        chunk[:, None] == (np.arange(D)[None, :] // DIM_HEAD)
    ).astype(np.float32)
    # row-replication selector rrep[r, i] = (i == r // NUM_HEAD) and its transpose
    rrep = (np.arange(L)[None, :] == (r // NUM_HEAD)[:, None]).astype(np.float32)
    c[:, OFF_RREP:OFF_RREP + L] = rrep
    c[0:L, OFF_RREPT:OFF_RREPT + NSTK_B] = rrep.T
    return c


_CONSTS = _build_consts()


def _layernorm(x, gamma, beta):
    mu = jnp.mean(x, axis=-1, keepdims=True)
    var = jnp.mean((x - mu) ** 2, axis=-1, keepdims=True)
    return (x - mu) * lax.rsqrt(var + EPS) * gamma + beta


# ---------------- fused kernel (one batch element per grid step) ----------------

def encoder_layer_kernel(x_ref, c_ref, wqkv_ref, wmisc_ref, o_ref,
                         xbig_ref, qkv_ref, cbig_ref):
    f32 = jnp.float32
    xb = x_ref[...]                                            # (L, D)

    # precomputed constants (all Ref slices at static offsets)
    bias = c_ref[:, OFF_BIAS:OFF_BIAS + NSTK_B]                # (32, 32)
    rrep = c_ref[:, OFF_RREP:OFF_RREP + L]                     # (32, 8)
    rrep_t = c_ref[0:L, OFF_RREPT:OFF_RREPT + NSTK_B]          # (8, 32)

    # ---- head-split QKV: replicate rows, lane-tile + chunk-mask, ONE K=128 matmul
    xrep = jnp.dot(rrep, xb, preferred_element_type=f32)       # (32, D): xb[r//4]
    for ci in range(NUM_HEAD):
        m = c_ref[:, OFF_MASK_BIG + ci * D:OFF_MASK_BIG + (ci + 1) * D]
        xbig_ref[:, ci * D:(ci + 1) * D] = xrep * m            # masked lane tile
    qkv_ref[...] = jnp.dot(xbig_ref[...], wqkv_ref[...],
                           preferred_element_type=f32)         # (32, 3*DIM_HEAD)
    q3 = qkv_ref[:, 0:DIM_HEAD]                                # scale folded into Wq
    k3 = qkv_ref[:, DIM_HEAD:2 * DIM_HEAD]
    v3 = qkv_ref[:, 2 * DIM_HEAD:3 * DIM_HEAD]

    # ---- all heads at once: block-diagonal (32, 32) scores + softmax
    s = lax.dot_general(q3, k3, (((1,), (1,)), ((), ())),
                        preferred_element_type=f32) + bias     # Q @ K^T + mask bias
    s = s - jnp.max(s, axis=-1, keepdims=True)
    p = jnp.exp(s)
    p = p * pl.reciprocal(jnp.sum(p, axis=-1, keepdims=True), approx=True)
    ctx = jnp.dot(p, v3, preferred_element_type=f32)           # (32, DIM_HEAD)

    # ---- inverse head view + output projection
    for ci in range(NUM_HEAD):
        m = c_ref[:, OFF_MASK_SML + ci * DIM_HEAD:OFF_MASK_SML + (ci + 1) * DIM_HEAD]
        cbig_ref[:, ci * DIM_HEAD:(ci + 1) * DIM_HEAD] = ctx * m
    ctx_view = jnp.dot(rrep_t, cbig_ref[...],
                       preferred_element_type=f32)             # (L, D) context.view
    wo_t = wmisc_ref[0:D, WO_COL:WO_COL + D]
    attn_out = jnp.dot(ctx_view, wo_t, preferred_element_type=f32)

    # ---- residual + LN, FFN, residual + LN
    g1 = wmisc_ref[LN_ROW + 0:LN_ROW + 1, 0:D]
    b1 = wmisc_ref[LN_ROW + 1:LN_ROW + 2, 0:D]
    g2 = wmisc_ref[LN_ROW + 2:LN_ROW + 3, 0:D]
    b2 = wmisc_ref[LN_ROW + 3:LN_ROW + 4, 0:D]
    out1 = _layernorm(attn_out + xb, g1, b1)
    w1_t = wmisc_ref[0:D, W1_COL:W1_COL + DIM_HIDDEN]
    w2_t = wmisc_ref[0:DIM_HIDDEN, W2_COL:W2_COL + D]
    h = jnp.maximum(jnp.dot(out1, w1_t, preferred_element_type=f32), 0.0)
    ffn = jnp.dot(h, w2_t, preferred_element_type=f32)
    o_ref[...] = _layernorm(ffn + out1, g2, b2).astype(o_ref.dtype)


# ---------------- wrapper ----------------

def encoder_layer(x, params):
    wq, wk, wv, wo, w1, w2, g1, b1, g2, b2 = params
    f32 = jnp.float32
    scale = DIM_HEAD ** (-0.5)

    x2 = x.reshape(B * L, D)

    # QKV weights stacked along the K=128 contraction dim of the chunk-tiled
    # activations: Wstack[c*D + j, t*DIM_HEAD + d] = W_t.T[j, c*DIM_HEAD + d],
    # with the attention scale folded into the Q block.
    def col_chunks(w_t):                     # (D, D) -> (NUM_HEAD, D, DIM_HEAD)
        return w_t.reshape(D, NUM_HEAD, DIM_HEAD).transpose(1, 0, 2)

    wstack = jnp.concatenate(
        [col_chunks((wq * scale).T), col_chunks(wk.T), col_chunks(wv.T)],
        axis=2).reshape(NUM_HEAD * D, 3 * DIM_HEAD)            # (128, 24)

    # Wo^T / W1^T / W2^T and the LayerNorm params packed into one (64, 128) buffer.
    wmisc = jnp.zeros((DIM_HIDDEN, WMISC_W), f32)
    wmisc = wmisc.at[0:D, WO_COL:WO_COL + D].set(wo.T)
    wmisc = wmisc.at[0:D, W1_COL:W1_COL + DIM_HIDDEN].set(w1.T)
    wmisc = wmisc.at[0:DIM_HIDDEN, W2_COL:W2_COL + D].set(w2.T)
    ln = jnp.concatenate([g1, b1, g2, b2], axis=0)             # (4, D)
    wmisc = wmisc.at[LN_ROW:LN_ROW + 4, 0:D].set(ln)

    consts = jnp.asarray(_CONSTS)                              # (32, 232)

    out2 = pl.pallas_call(
        encoder_layer_kernel,
        out_shape=jax.ShapeDtypeStruct((B * L, D), f32),
        grid=(B,),                                             # batch elements are independent
        in_specs=[
            pl.BlockSpec((L, D), lambda b: (b, 0)),            # per-batch activation
            pl.BlockSpec((NSTK_B, CONST_W), lambda b: (0, 0)),           # packed constants
            pl.BlockSpec((NUM_HEAD * D, 3 * DIM_HEAD), lambda b: (0, 0)),  # stacked QKV weights
            pl.BlockSpec((DIM_HIDDEN, WMISC_W), lambda b: (0, 0)),         # Wo/W1/W2 + LN
        ],
        out_specs=pl.BlockSpec((L, D), lambda b: (b, 0)),
        scratch_shapes=[
            pltpu.VMEM((NSTK_B, NUM_HEAD * D), f32),           # lane-tiled activations
            pltpu.VMEM((NSTK_B, 3 * DIM_HEAD), f32),           # fused QKV result
            pltpu.VMEM((NSTK_B, D), f32),                      # lane-tiled context
        ],
        compiler_params=pltpu.CompilerParams(
            dimension_semantics=("parallel",)),                # v7x: shard batch over 2 TCs
    )(x2, consts, wstack, wmisc)

    return out2.reshape(B, L, D)


# ---------------- pure-JAX reference (PyTorch semantics) ----------------

def reference(x, params):
    wq, wk, wv, wo, w1, w2, g1, b1, g2, b2 = params

    def ln(t, g, b):
        mu = jnp.mean(t, axis=-1, keepdims=True)
        var = jnp.mean((t - mu) ** 2, axis=-1, keepdims=True)
        return (t - mu) / jnp.sqrt(var + EPS) * g[0] + b[0]

    Q = x @ wq.T
    K = x @ wk.T
    V = x @ wv.T
    Q = Q.reshape(B * NUM_HEAD, L, DIM_HEAD)
    K = K.reshape(B * NUM_HEAD, L, DIM_HEAD)
    V = V.reshape(B * NUM_HEAD, L, DIM_HEAD)
    scale = DIM_HEAD ** (-0.5)
    att = jnp.einsum('bld,bmd->blm', Q, K) * scale
    att = jax.nn.softmax(att, axis=-1)
    ctx = jnp.einsum('blm,bmd->bld', att, V).reshape(B, L, D)
    out = ctx @ wo.T + x
    out = ln(out, g1, b1)
    f = jnp.maximum(out @ w1.T, 0.0) @ w2.T
    return ln(f + out, g2, b2)


# ---------------- main ----------------

if __name__ == "__main__":
    key = jax.random.PRNGKey(0)
    ks = jax.random.split(key, 8)
    f32 = jnp.float32

    # deterministic synthetic parameters (PyTorch nn.Linear layout: [out, in])
    wq = 0.05 * jax.random.normal(ks[0], (D, D), f32)
    wk = 0.05 * jax.random.normal(ks[1], (D, D), f32)
    wv = 0.05 * jax.random.normal(ks[2], (D, D), f32)
    wo = 0.05 * jax.random.normal(ks[3], (D, D), f32)
    w1 = 0.05 * jax.random.normal(ks[4], (DIM_HIDDEN, D), f32)
    w2 = 0.05 * jax.random.normal(ks[5], (D, DIM_HIDDEN), f32)
    g1 = jnp.ones((1, D), f32)
    b1 = jnp.zeros((1, D), f32)
    g2 = jnp.ones((1, D), f32)
    b2 = jnp.zeros((1, D), f32)
    params = (wq, wk, wv, wo, w1, w2, g1, b1, g2, b2)

    x = jax.random.normal(ks[6], (B, L, D), f32)

    out = encoder_layer(x, params)
    out = jax.block_until_ready(out)

    ref = jax.block_until_ready(reference(x, params))
    assert out.shape == (B, L, D)
    # Tolerance 2e-3 covers the approx (EUP) reciprocal in the softmax and the
    # attention scale folded into W_Q; any real bug would be far larger.
    assert jnp.allclose(out, ref, rtol=2e-3, atol=2e-3), "mismatch vs reference"

    print("KERNEL_OK")
</pallas_src>

<mosaic_0001>
module attributes {stable_mosaic.version = 11 : i64} {
  func.func @encoder_layer_kernel(%arg0: i32, %arg1: memref<8x32xf32, #tpu.memory_space<vmem>>, %arg2: memref<32x232xf32, #tpu.memory_space<vmem>>, %arg3: memref<128x24xf32, #tpu.memory_space<vmem>>, %arg4: memref<64x128xf32, #tpu.memory_space<vmem>>, %arg5: memref<8x32xf32, #tpu.memory_space<vmem>>, %arg6: memref<32x128xf32, #tpu.memory_space<vmem>>, %arg7: memref<32x24xf32, #tpu.memory_space<vmem>>, %arg8: memref<32x32xf32, #tpu.memory_space<vmem>>) attributes {dimension_semantics = [#tpu.dimension_semantics<parallel>], iteration_bounds = array<i64: 2>, scalar_prefetch = 0 : i64, scratch_operands = 3 : i64, tpu.core_type = #tpu.core_type<tc>, window_params = [{transform_indices = @transform_0, window_bounds = array<i64: 8, 32>}, {pipeline_mode = #tpu.pipeline_mode<synchronous>, transform_indices = @transform_1, window_bounds = array<i64: 32, 232>}, {pipeline_mode = #tpu.pipeline_mode<synchronous>, transform_indices = @transform_2, window_bounds = array<i64: 128, 24>}, {pipeline_mode = #tpu.pipeline_mode<synchronous>, transform_indices = @transform_3, window_bounds = array<i64: 64, 128>}, {transform_indices = @transform_4, window_bounds = array<i64: 8, 32>}]} {
    %c0 = arith.constant 0 : index
    %c0_0 = arith.constant 0 : index
    %0 = vector.load %arg1[%c0, %c0_0] : memref<8x32xf32, #tpu.memory_space<vmem>>, vector<8x32xf32>
    %c0_1 = arith.constant 0 : index
    %c128 = arith.constant 128 : index
    %1 = vector.load %arg2[%c0_1, %c128] : memref<32x232xf32, #tpu.memory_space<vmem>>, vector<32x32xf32>
    %c0_2 = arith.constant 0 : index
    %c192 = arith.constant 192 : index
    %2 = vector.load %arg2[%c0_2, %c192] : memref<32x232xf32, #tpu.memory_space<vmem>>, vector<32x8xf32>
    %c0_3 = arith.constant 0 : index
    %c200 = arith.constant 200 : index
    %3 = vector.load %arg2[%c0_3, %c200] : memref<32x232xf32, #tpu.memory_space<vmem>>, vector<8x32xf32>
    %cst = arith.constant dense<0.000000e+00> : vector<32x32xf32>
    %4 = tpu.matmul %2, %0, %cst {dimension_numbers = #tpu.dot_dimension_numbers<[1], [0], [0], [1], [0, 0, 1, 1], [], []>} : vector<32x8xf32>, vector<8x32xf32>, vector<32x32xf32> -> vector<32x32xf32>
    %c0_4 = arith.constant 0 : index
    %c0_5 = arith.constant 0 : index
    %5 = vector.load %arg2[%c0_4, %c0_5] : memref<32x232xf32, #tpu.memory_space<vmem>>, vector<32x32xf32>
    %6 = arith.mulf %4, %5 : vector<32x32xf32>
    %c0_6 = arith.constant 0 : index
    %c0_7 = arith.constant 0 : index
    %7 = vector.load %arg6[%c0_6, %c0_7] : memref<32x128xf32, #tpu.memory_space<vmem>>, vector<32x32xf32>
    tpu.vector_store %arg6[%c0_6, %c0_7], %6 {strides = array<i32>} : memref<32x128xf32, #tpu.memory_space<vmem>>, vector<32x32xf32>,
    %c0_8 = arith.constant 0 : index
    %c32 = arith.constant 32 : index
    %8 = vector.load %arg2[%c0_8, %c32] : memref<32x232xf32, #tpu.memory_space<vmem>>, vector<32x32xf32>
    %9 = arith.mulf %4, %8 : vector<32x32xf32>
    %c0_9 = arith.constant 0 : index
    %c32_10 = arith.constant 32 : index
    %10 = vector.load %arg6[%c0_9, %c32_10] : memref<32x128xf32, #tpu.memory_space<vmem>>, vector<32x32xf32>
    tpu.vector_store %arg6[%c0_9, %c32_10], %9 {strides = array<i32>} : memref<32x128xf32, #tpu.memory_space<vmem>>, vector<32x32xf32>,
    %c0_11 = arith.constant 0 : index
    %c64 = arith.constant 64 : index
    %11 = vector.load %arg2[%c0_11, %c64] : memref<32x232xf32, #tpu.memory_space<vmem>>, vector<32x32xf32>
    %12 = arith.mulf %4, %11 : vector<32x32xf32>
    %c0_12 = arith.constant 0 : index
    %c64_13 = arith.constant 64 : index
    %13 = vector.load %arg6[%c0_12, %c64_13] : memref<32x128xf32, #tpu.memory_space<vmem>>, vector<32x32xf32>
    tpu.vector_store %arg6[%c0_12, %c64_13], %12 {strides = array<i32>} : memref<32x128xf32, #tpu.memory_space<vmem>>, vector<32x32xf32>,
    %c0_14 = arith.constant 0 : index
    %c96 = arith.constant 96 : index
    %14 = vector.load %arg2[%c0_14, %c96] : memref<32x232xf32, #tpu.memory_space<vmem>>, vector<32x32xf32>
    %15 = arith.mulf %4, %14 : vector<32x32xf32>
    %c0_15 = arith.constant 0 : index
    %c96_16 = arith.constant 96 : index
    %16 = vector.load %arg6[%c0_15, %c96_16] : memref<32x128xf32, #tpu.memory_space<vmem>>, vector<32x32xf32>
    tpu.vector_store %arg6[%c0_15, %c96_16], %15 {strides = array<i32>} : memref<32x128xf32, #tpu.memory_space<vmem>>, vector<32x32xf32>,
    %c0_17 = arith.constant 0 : index
    %c0_18 = arith.constant 0 : index
    %17 = vector.load %arg6[%c0_17, %c0_18] : memref<32x128xf32, #tpu.memory_space<vmem>>, vector<32x128xf32>
    %c0_19 = arith.constant 0 : index
    %c0_20 = arith.constant 0 : index
    %18 = vector.load %arg3[%c0_19, %c0_20] : memref<128x24xf32, #tpu.memory_space<vmem>>, vector<128x24xf32>
    %cst_21 = arith.constant dense<0.000000e+00> : vector<32x24xf32>
    %19 = tpu.matmul %17, %18, %cst_21 {dimension_numbers = #tpu.dot_dimension_numbers<[1], [0], [0], [1], [0, 0, 1, 1], [], []>} : vector<32x128xf32>, vector<128x24xf32>, vector<32x24xf32> -> vector<32x24xf32>
    %c0_22 = arith.constant 0 : index
    %c0_23 = arith.constant 0 : index
    %20 = vector.load %arg7[%c0_22, %c0_23] : memref<32x24xf32, #tpu.memory_space<vmem>>, vector<32x24xf32>
    tpu.vector_store %arg7[%c0_22, %c0_23], %19 {strides = array<i32>} : memref<32x24xf32, #tpu.memory_space<vmem>>, vector<32x24xf32>,
    %c0_24 = arith.constant 0 : index
    %c0_25 = arith.constant 0 : index
    %21 = vector.load %arg7[%c0_24, %c0_25] : memref<32x24xf32, #tpu.memory_space<vmem>>, vector<32x8xf32>
    %c0_26 = arith.constant 0 : index
    %c8 = arith.constant 8 : index
    %22 = vector.load %arg7[%c0_26, %c8] : memref<32x24xf32, #tpu.memory_space<vmem>>, vector<32x8xf32>
    %c0_27 = arith.constant 0 : index
    %c16 = arith.constant 16 : index
    %23 = vector.load %arg7[%c0_27, %c16] : memref<32x24xf32, #tpu.memory_space<vmem>>, vector<32x8xf32>
    %cst_28 = arith.constant dense<0.000000e+00> : vector<32x32xf32>
    %24 = tpu.matmul %21, %22, %cst_28 {dimension_numbers = #tpu.dot_dimension_numbers<[1], [1], [0], [0], [0, 0, 1, 0], [], []>} : vector<32x8xf32>, vector<32x8xf32>, vector<32x32xf32> -> vector<32x32xf32>
    %25 = arith.addf %24, %1 : vector<32x32xf32>
    %cst_29 = arith.constant dense<0xFF800000> : vector<32xf32>
    %26 = vector.multi_reduction <maximumf>, %25, %cst_29 [1] : vector<32x32xf32> to vector<32xf32>
    %27 = vector.shape_cast %26 : vector<32xf32> to vector<32x1xf32>
    %28 = vector.broadcast %27 : vector<32x1xf32> to vector<32x32xf32>
    %29 = arith.subf %25, %28 : vector<32x32xf32>
    %30 = math.exp %29 : vector<32x32xf32>
    %cst_30 = arith.constant dense<0.000000e+00> : vector<32xf32>
    %31 = vector.multi_reduction <add>, %30, %cst_30 [1] : vector<32x32xf32> to vector<32xf32>
    %32 = vector.shape_cast %31 : vector<32xf32> to vector<32x1xf32>
    %33 = tpu.reciprocal %32 {approx = true} : vector<32x1xf32> -> vector<32x1xf32>
    %34 = vector.broadcast %33 : vector<32x1xf32> to vector<32x32xf32>
    %35 = arith.mulf %30, %34 : vector<32x32xf32>
    %cst_31 = arith.constant dense<0.000000e+00> : vector<32x8xf32>
    %36 = tpu.matmul %35, %23, %cst_31 {dimension_numbers = #tpu.dot_dimension_numbers<[1], [0], [0], [1], [0, 0, 1, 1], [], []>} : vector<32x32xf32>, vector<32x8xf32>, vector<32x8xf32> -> vector<32x8xf32>
    %c0_32 = arith.constant 0 : index
    %c160 = arith.constant 160 : index
    %37 = vector.load %arg2[%c0_32, %c160] : memref<32x232xf32, #tpu.memory_space<vmem>>, vector<32x8xf32>
    %38 = arith.mulf %36, %37 : vector<32x8xf32>
    %c0_33 = arith.constant 0 : index
    %c0_34 = arith.constant 0 : index
    %39 = vector.load %arg8[%c0_33, %c0_34] : memref<32x32xf32, #tpu.memory_space<vmem>>, vector<32x8xf32>
    tpu.vector_store %arg8[%c0_33, %c0_34], %38 {strides = array<i32>} : memref<32x32xf32, #tpu.memory_space<vmem>>, vector<32x8xf32>,
    %c0_35 = arith.constant 0 : index
    %c168 = arith.constant 168 : index
    %40 = vector.load %arg2[%c0_35, %c168] : memref<32x232xf32, #tpu.memory_space<vmem>>, vector<32x8xf32>
    %41 = arith.mulf %36, %40 : vector<32x8xf32>
    %c0_36 = arith.constant 0 : index
    %c8_37 = arith.constant 8 : index
    %42 = vector.load %arg8[%c0_36, %c8_37] : memref<32x32xf32, #tpu.memory_space<vmem>>, vector<32x8xf32>
    tpu.vector_store %arg8[%c0_36, %c8_37], %41 {strides = array<i32>} : memref<32x32xf32, #tpu.memory_space<vmem>>, vector<32x8xf32>,
    %c0_38 = arith.constant 0 : index
    %c176 = arith.constant 176 : index
    %43 = vector.load %arg2[%c0_38, %c176] : memref<32x232xf32, #tpu.memory_space<vmem>>, vector<32x8xf32>
    %44 = arith.mulf %36, %43 : vector<32x8xf32>
    %c0_39 = arith.constant 0 : index
    %c16_40 = arith.constant 16 : index
    %45 = vector.load %arg8[%c0_39, %c16_40] : memref<32x32xf32, #tpu.memory_space<vmem>>, vector<32x8xf32>
    tpu.vector_store %arg8[%c0_39, %c16_40], %44 {strides = array<i32>} : memref<32x32xf32, #tpu.memory_space<vmem>>, vector<32x8xf32>,
    %c0_41 = arith.constant 0 : index
    %c184 = arith.constant 184 : index
    %46 = vector.load %arg2[%c0_41, %c184] : memref<32x232xf32, #tpu.memory_space<vmem>>, vector<32x8xf32>
    %47 = arith.mulf %36, %46 : vector<32x8xf32>
    %c0_42 = arith.constant 0 : index
    %c24 = arith.constant 24 : index
    %48 = vector.load %arg8[%c0_42, %c24] : memref<32x32xf32, #tpu.memory_space<vmem>>, vector<32x8xf32>
    tpu.vector_store %arg8[%c0_42, %c24], %47 {strides = array<i32>} : memref<32x32xf32, #tpu.memory_space<vmem>>, vector<32x8xf32>,
    %c0_43 = arith.constant 0 : index
    %c0_44 = arith.constant 0 : index
    %49 = vector.load %arg8[%c0_43, %c0_44] : memref<32x32xf32, #tpu.memory_space<vmem>>, vector<32x32xf32>
    %cst_45 = arith.constant dense<0.000000e+00> : vector<8x32xf32>
    %50 = tpu.matmul %3, %49, %cst_45 {dimension_numbers = #tpu.dot_dimension_numbers<[1], [0], [0], [1], [0, 0, 1, 1], [], []>} : vector<8x32xf32>, vector<32x32xf32>, vector<8x32xf32> -> vector<8x32xf32>
    %c0_46 = arith.constant 0 : index
    %c0_47 = arith.constant 0 : index
    %51 = vector.load %arg4[%c0_46, %c0_47] : memref<64x128xf32, #tpu.memory_space<vmem>>, vector<32x32xf32>
    %cst_48 = arith.constant dense<0.000000e+00> : vector<8x32xf32>
    %52 = tpu.matmul %50, %51, %cst_48 {dimension_numbers = #tpu.dot_dimension_numbers<[1], [0], [0], [1], [0, 0, 1, 1], [], []>} : vector<8x32xf32>, vector<32x32xf32>, vector<8x32xf32> -> vector<8x32xf32>
    %c32_49 = arith.constant 32 : index
    %c0_50 = arith.constant 0 : index
    %53 = vector.load %arg4[%c32_49, %c0_50] : memref<64x128xf32, #tpu.memory_space<vmem>>, vector<1x32xf32>
    %c33 = arith.constant 33 : index
    %c0_51 = arith.constant 0 : index
    %54 = vector.load %arg4[%c33, %c0_51] : memref<64x128xf32, #tpu.memory_space<vmem>>, vector<1x32xf32>
    %c34 = arith.constant 34 : index
    %c0_52 = arith.constant 0 : index
    %55 = vector.load %arg4[%c34, %c0_52] : memref<64x128xf32, #tpu.memory_space<vmem>>, vector<1x32xf32>
    %c35 = arith.constant 35 : index
    %c0_53 = arith.constant 0 : index
    %56 = vector.load %arg4[%c35, %c0_53] : memref<64x128xf32, #tpu.memory_space<vmem>>, vector<1x32xf32>
    %57 = arith.addf %52, %0 : vector<8x32xf32>
    %cst_54 = arith.constant dense<0.000000e+00> : vector<8xf32>
    %58 = vector.multi_reduction <add>, %57, %cst_54 [1] : vector<8x32xf32> to vector<8xf32>
    %59 = vector.shape_cast %58 : vector<8xf32> to vector<8x1xf32>
    %cst_55 = arith.constant 3.200000e+01 : f32
    %60 = vector.broadcast %cst_55 : f32 to vector<8x1xf32>
    %61 = arith.divf %59, %60 : vector<8x1xf32>
    %62 = vector.broadcast %61 : vector<8x1xf32> to vector<8x32xf32>
    %63 = arith.subf %57, %62 : vector<8x32xf32>
    %64 = arith.mulf %63, %63 : vector<8x32xf32>
    %cst_56 = arith.constant dense<0.000000e+00> : vector<8xf32>
    %65 = vector.multi_reduction <add>, %64, %cst_56 [1] : vector<8x32xf32> to vector<8xf32>
    %66 = vector.shape_cast %65 : vector<8xf32> to vector<8x1xf32>
    %cst_57 = arith.constant 3.200000e+01 : f32
    %67 = vector.broadcast %cst_57 : f32 to vector<8x1xf32>
    %68 = arith.divf %66, %67 : vector<8x1xf32>
    %69 = vector.broadcast %61 : vector<8x1xf32> to vector<8x32xf32>
    %70 = arith.subf %57, %69 : vector<8x32xf32>
    %cst_58 = arith.constant 9.99999974E-6 : f32
    %71 = vector.broadcast %cst_58 : f32 to vector<8x1xf32>
    %72 = arith.addf %68, %71 : vector<8x1xf32>
    %73 = math.rsqrt %72 : vector<8x1xf32>
    %74 = vector.broadcast %73 : vector<8x1xf32> to vector<8x32xf32>
    %75 = arith.mulf %70, %74 : vector<8x32xf32>
    %76 = vector.broadcast %53 : vector<1x32xf32> to vector<8x32xf32>
    %77 = arith.mulf %75, %76 : vector<8x32xf32>
    %78 = vector.broadcast %54 : vector<1x32xf32> to vector<8x32xf32>
    %79 = arith.addf %77, %78 : vector<8x32xf32>
    %c0_59 = arith.constant 0 : index
    %c32_60 = arith.constant 32 : index
    %80 = vector.load %arg4[%c0_59, %c32_60] : memref<64x128xf32, #tpu.memory_space<vmem>>, vector<32x64xf32>
    %c0_61 = arith.constant 0 : index
    %c96_62 = arith.constant 96 : index
    %81 = vector.load %arg4[%c0_61, %c96_62] : memref<64x128xf32, #tpu.memory_space<vmem>>, vector<64x32xf32>
    %cst_63 = arith.constant dense<0.000000e+00> : vector<8x64xf32>
    %82 = tpu.matmul %79, %80, %cst_63 {dimension_numbers = #tpu.dot_dimension_numbers<[1], [0], [0], [1], [0, 0, 1, 1], [], []>} : vector<8x32xf32>, vector<32x64xf32>, vector<8x64xf32> -> vector<8x64xf32>
    %cst_64 = arith.constant 0.000000e+00 : f32
    %83 = vector.broadcast %cst_64 : f32 to vector<8x64xf32>
    %84 = arith.maximumf %82, %83 : vector<8x64xf32>
    %cst_65 = arith.constant dense<0.000000e+00> : vector<8x32xf32>
    %85 = tpu.matmul %84, %81, %cst_65 {dimension_numbers = #tpu.dot_dimension_numbers<[1], [0], [0], [1], [0, 0, 1, 1], [], []>} : vector<8x64xf32>, vector<64x32xf32>, vector<8x32xf32> -> vector<8x32xf32>
    %86 = arith.addf %85, %79 : vector<8x32xf32>
    %cst_66 = arith.constant dense<0.000000e+00> : vector<8xf32>
    %87 = vector.multi_reduction <add>, %86, %cst_66 [1] : vector<8x32xf32> to vector<8xf32>
    %88 = vector.shape_cast %87 : vector<8xf32> to vector<8x1xf32>
    %cst_67 = arith.constant 3.200000e+01 : f32
    %89 = vector.broadcast %cst_67 : f32 to vector<8x1xf32>
    %90 = arith.divf %88, %89 : vector<8x1xf32>
    %91 = vector.broadcast %90 : vector<8x1xf32> to vector<8x32xf32>
    %92 = arith.subf %86, %91 : vector<8x32xf32>
    %93 = arith.mulf %92, %92 : vector<8x32xf32>
    %cst_68 = arith.constant dense<0.000000e+00> : vector<8xf32>
    %94 = vector.multi_reduction <add>, %93, %cst_68 [1] : vector<8x32xf32> to vector<8xf32>
    %95 = vector.shape_cast %94 : vector<8xf32> to vector<8x1xf32>
    %cst_69 = arith.constant 3.200000e+01 : f32
    %96 = vector.broadcast %cst_69 : f32 to vector<8x1xf32>
    %97 = arith.divf %95, %96 : vector<8x1xf32>
    %98 = vector.broadcast %90 : vector<8x1xf32> to vector<8x32xf32>
    %99 = arith.subf %86, %98 : vector<8x32xf32>
    %cst_70 = arith.constant 9.99999974E-6 : f32
    %100 = vector.broadcast %cst_70 : f32 to vector<8x1xf32>
    %101 = arith.addf %97, %100 : vector<8x1xf32>
    %102 = math.rsqrt %101 : vector<8x1xf32>
    %103 = vector.broadcast %102 : vector<8x1xf32> to vector<8x32xf32>
    %104 = arith.mulf %99, %103 : vector<8x32xf32>
    %105 = vector.broadcast %55 : vector<1x32xf32> to vector<8x32xf32>
    %106 = arith.mulf %104, %105 : vector<8x32xf32>
    %107 = vector.broadcast %56 : vector<1x32xf32> to vector<8x32xf32>
    %108 = arith.addf %106, %107 : vector<8x32xf32>
    %c0_71 = arith.constant 0 : index
    %c0_72 = arith.constant 0 : index
    %109 = vector.load %arg5[%c0_71, %c0_72] : memref<8x32xf32, #tpu.memory_space<vmem>>, vector<8x32xf32>
    tpu.vector_store %arg5[%c0_71, %c0_72], %108 {strides = array<i32>} : memref<8x32xf32, #tpu.memory_space<vmem>>, vector<8x32xf32>,
    return
  }
  func.func @transform_0(%arg0: i32) -> (i32, i32) {
    %c0_i32 = arith.constant 0 : i32
    %c0_i32_0 = arith.constant 0 : i32
    return %arg0, %c0_i32 : i32, i32
  }
  func.func @transform_1(%arg0: i32) -> (i32, i32) {
    %c0_i32 = arith.constant 0 : i32
    %c0_i32_0 = arith.constant 0 : i32
    %c0_i32_1 = arith.constant 0 : i32
    return %c0_i32, %c0_i32_0 : i32, i32
  }
  func.func @transform_2(%arg0: i32) -> (i32, i32) {
    %c0_i32 = arith.constant 0 : i32
    %c0_i32_0 = arith.constant 0 : i32
    %c0_i32_1 = arith.constant 0 : i32
    return %c0_i32, %c0_i32_0 : i32, i32
  }
  func.func @transform_3(%arg0: i32) -> (i32, i32) {
    %c0_i32 = arith.constant 0 : i32
    %c0_i32_0 = arith.constant 0 : i32
    %c0_i32_1 = arith.constant 0 : i32
    return %c0_i32, %c0_i32_0 : i32, i32
  }
  func.func @transform_4(%arg0: i32) -> (i32, i32) {
    %c0_i32 = arith.constant 0 : i32
    %c0_i32_0 = arith.constant 0 : i32
    return %arg0, %c0_i32 : i32, i32
  }
}

</mosaic_0001>

<llo_original>
// kernel: tpu_custom_call.1
$region0: #{tpu_custom_call.1}
  #allocation0 [shape = 'u32[]', space=smem, size = 0x4, offset = 0x4, fixed_abs, tag = 'smem constant byte address 0x4 - core index']
  #allocation1 [shape = 'u32[72,128]{1,0:T(1,128)}', space=vmem, size = 0x9000, scoped, tag = 'internal scratch']
  #allocation2 [shape = 'f32[32,128]{1,0:T(8,128)}', space=vmem, size = 0x4000, scoped, tag = 'scratch operand']
  #allocation3 [shape = 'f32[32,24]{1,0:T(8,128)}', space=vmem, size = 0x4000, scoped, tag = 'scratch operand']
  #allocation4 [shape = 'f32[32,32]{1,0:T(8,128)}', space=vmem, size = 0x4000, scoped, tag = 'scratch operand']
  %s0 = inlined_call_operand.vmem [shape: f32[16,32], index: 0, kind: input, shape index: {}]
  %s1 = inlined_call_operand.vmem [shape: f32[32,232], index: 1, kind: input, shape index: {}]
  %s2 = inlined_call_operand.vmem [shape: f32[128,24], index: 2, kind: input, shape index: {}]
  %s3 = inlined_call_operand.vmem [shape: f32[64,128], index: 3, kind: input, shape index: {}]
  %s4 = inlined_call_operand.hbm [shape: f32[16,32], index: 4, kind: output, shape index: {}]
  %s5 = sld [smem:[#allocation0]]
  $region49: #{tpu_custom_call.1} parent=0
    _
  %s7 = ssub.s32 1, %s5
  %s8 = scalar_select 0, %s7, %s5
  $region1: #{tpu_custom_call.1} parent=0
    #allocation5 [shape = 'u8[8192]{0}', space=vmem, size = 0x2000, scoped, tag = 'output window, operand 0']
    #allocation6 [shape = 's32[2]{0}', space=sflag, size = 0x8, scoped, tag = 'scoped memory for tpu_custom_call.1']
    %9 = vsyncpa [#allocation6], 0
    %s10 = scalar_lea.sflag [#allocation6], 1
    %11 = vsyncpa %s10, 0
    loop: start=0, step=1, limit=4
    $region2: #{tpu_custom_call.1} parent=1 // loop_pre_header
      _
    $region3: #{tpu_custom_call.1} parent=1 // loop_header
      %s13 = sphi 0, %s17
      %p14 = scmp.ge.s32.totalorder %s13, 4
      %s23 = sphi 0, %s25
      %s26 = sphi 0, %s23
      %s27 = sphi 0, %s26
      %s43 = sphi 0, %s27
      %s47 = sphi 0, %s47
      %s49 = sphi 0, %s47
      %s50 = sphi 0, %s49
      %s64 = sphi 0, %s50
      %s68 = sphi 0, %s68
      %s70 = sphi 0, %s68
      %s71 = sphi 0, %s70
      %s85 = sphi 0, %s71
      %s89 = sphi 0, %s89
      %s91 = sphi 0, %s89
      %s92 = sphi 0, %s91
      %s106 = sphi 0, %s92
      %s112 = sphi 0, %s114
      %s115 = sphi 0, %s112
      %s116 = sphi 0, %s115
      %s132 = sphi 0, %s116
    $region4: #{tpu_custom_call.1} parent=1 // loop_header_branch
      %16 = sbr.rel (%p14) target = $region8
    $region5: #{tpu_custom_call.1} parent=1 // loop_body
      %s18 = ssub.s32 %s13, 1
      %s19 = ssub.s32 %s13, 2
      %s20 = sadd.s32 %s13, 1
      %s21 = ssub.s32 %s13, %s20
      %p22 = scmp.eq.s32.totalorder %s21, 0
      %s24 = sadd.s32 %s23, 1
      %s25 = scalar_select %p22, %s23, %s24
      %p28 = pneg %p22
      %p29 = scmp.eq.s32.totalorder %s13, 1
      %p30 = por %p28, %p29
      %p31 = scmp.ne.s32.totalorder %s23, %s26
      %p32 = scmp.eq.s32.totalorder %s13, 0
      %p33 = por %p31, %p32
      %p34 = scmp.ne.s32.totalorder %s23, %s26
      %p35 = scmp.eq.s32.totalorder %s18, 1
      %p36 = por %p34, %p35
      %p37 = scmp.ne.s32.totalorder %s26, %s27
      %p38 = scmp.eq.s32.totalorder %s18, 0
      %p39 = por %p37, %p38
      %p40 = scmp.ne.s32.totalorder %s26, %s27
      %p41 = scmp.eq.s32.totalorder %s19, 1
      %p42 = por %p40, %p41
      %p44 = scmp.ne.s32.totalorder %s27, %s43
      %p45 = scmp.eq.s32.totalorder %s19, 0
      %p46 = por %p44, %p45
      %s48 = sadd.s32 %s47, 1
      %p51 = scmp.eq.s32.totalorder %s13, 1
      %p52 = scmp.ne.s32.totalorder %s47, %s49
      %p53 = scmp.eq.s32.totalorder %s13, 0
      %p54 = por %p52, %p53
      %p55 = scmp.ne.s32.totalorder %s47, %s49
      %p56 = scmp.eq.s32.totalorder %s18, 1
      %p57 = por %p55, %p56
      %p58 = scmp.ne.s32.totalorder %s49, %s50
      %p59 = scmp.eq.s32.totalorder %s18, 0
      %p60 = por %p58, %p59
      %p61 = scmp.ne.s32.totalorder %s49, %s50
      %p62 = scmp.eq.s32.totalorder %s19, 1
      %p63 = por %p61, %p62
      %p65 = scmp.ne.s32.totalorder %s50, %s64
      %p66 = scmp.eq.s32.totalorder %s19, 0
      %p67 = por %p65, %p66
      %s69 = sadd.s32 %s68, 1
      %p72 = scmp.eq.s32.totalorder %s13, 1
      %p73 = scmp.ne.s32.totalorder %s68, %s70
      %p74 = scmp.eq.s32.totalorder %s13, 0
      %p75 = por %p73, %p74
      %p76 = scmp.ne.s32.totalorder %s68, %s70
      %p77 = scmp.eq.s32.totalorder %s18, 1
      %p78 = por %p76, %p77
      %p79 = scmp.ne.s32.totalorder %s70, %s71
      %p80 = scmp.eq.s32.totalorder %s18, 0
      %p81 = por %p79, %p80
      %p82 = scmp.ne.s32.totalorder %s70, %s71
      %p83 = scmp.eq.s32.totalorder %s19, 1
      %p84 = por %p82, %p83
      %p86 = scmp.ne.s32.totalorder %s71, %s85
      %p87 = scmp.eq.s32.totalorder %s19, 0
      %p88 = por %p86, %p87
      %s90 = sadd.s32 %s89, 1
      %p93 = scmp.eq.s32.totalorder %s13, 1
      %p94 = scmp.ne.s32.totalorder %s89, %s91
      %p95 = scmp.eq.s32.totalorder %s13, 0
      %p96 = por %p94, %p95
      %p97 = scmp.ne.s32.totalorder %s89, %s91
      %p98 = scmp.eq.s32.totalorder %s18, 1
      %p99 = por %p97, %p98
      %p100 = scmp.ne.s32.totalorder %s91, %s92
      %p101 = scmp.eq.s32.totalorder %s18, 0
      %p102 = por %p100, %p101
      %p103 = scmp.ne.s32.totalorder %s91, %s92
      %p104 = scmp.eq.s32.totalorder %s19, 1
      %p105 = por %p103, %p104
      %p107 = scmp.ne.s32.totalorder %s92, %s106
      %p108 = scmp.eq.s32.totalorder %s19, 0
      %p109 = por %p107, %p108
      %s110 = ssub.s32 %s13, %s20
      %p111 = scmp.eq.s32.totalorder %s110, 0
      %s113 = sadd.s32 %s112, 1
      %s114 = scalar_select %p111, %s112, %s113
      %p117 = pneg %p111
      %p118 = scmp.eq.s32.totalorder %s13, 1
      %p119 = por %p117, %p118
      %p120 = scmp.ne.s32.totalorder %s112, %s115
      %p121 = scmp.eq.s32.totalorder %s13, 0
      %p122 = por %p120, %p121
      %p123 = scmp.ne.s32.totalorder %s112, %s115
      %p124 = scmp.eq.s32.totalorder %s18, 1
      %p125 = por %p123, %p124
      %p126 = scmp.ne.s32.totalorder %s115, %s116
      %p127 = scmp.eq.s32.totalorder %s18, 0
      %p128 = por %p126, %p127
      %p129 = scmp.ne.s32.totalorder %s115, %s116
      %p130 = scmp.eq.s32.totalorder %s19, 1
      %p131 = por %p129, %p130
      %p133 = scmp.ne.s32.totalorder %s116, %s132
      %p134 = scmp.eq.s32.totalorder %s19, 0
      %p135 = por %p133, %p134
      %p136 = scmp.le.s32.totalorder 1, %s13
      %p137 = scmp.lt.s32.totalorder %s13, 3
      %p138 = pnand %p136, %p137
      %p139 = pneg %p138
      // Predicated region
      $region9: #{tpu_custom_call.1} parent=5 // pred_check
        _
      $region10: #{tpu_custom_call.1} parent=5 // pred_check_branch
        %141 = sbr.rel (%p138) target = $region12
      $region11: #{tpu_custom_call.1} parent=5 // pred_region
        %s142 = ssub.s32 %s13, 1
        // Predicated region
        $region13: #{tpu_custom_call.1} parent=11 // pred_check
          %p143 = pneg %p60
        $region14: #{tpu_custom_call.1} parent=11 // pred_check_branch
          %145 = sbr.rel (%p143) target = $region16
        $region15: #{tpu_custom_call.1} parent=11 // pred_region
          _
        $region16: #{tpu_custom_call.1} parent=11 // pred_fallthru
          _
        // Predicated region
        $region17: #{tpu_custom_call.1} parent=11 // pred_check
          %p146 = pneg %p81
        $region18: #{tpu_custom_call.1} parent=11 // pred_check_branch
          %148 = sbr.rel (%p146) target = $region20
        $region19: #{tpu_custom_call.1} parent=11 // pred_region
          _
        $region20: #{tpu_custom_call.1} parent=11 // pred_fallthru
          _
        // Predicated region
        $region21: #{tpu_custom_call.1} parent=11 // pred_check
          %p149 = pneg %p102
        $region22: #{tpu_custom_call.1} parent=11 // pred_check_branch
          %151 = sbr.rel (%p149) target = $region24
        $region23: #{tpu_custom_call.1} parent=11 // pred_region
          _
        $region24: #{tpu_custom_call.1} parent=11 // pred_fallthru
          _
      $region12: #{tpu_custom_call.1} parent=5 // pred_fallthru
        _
      %p152 = scmp.lt.s32.totalorder %s13, 2
      // Predicated region
      $region25: #{tpu_custom_call.1} parent=5 // pred_check
        %p153 = pneg %p152
      $region26: #{tpu_custom_call.1} parent=5 // pred_check_branch
        %155 = sbr.rel (%p153) target = $region28
      $region27: #{tpu_custom_call.1} parent=5 // pred_region
        // Predicated region
        $region29: #{tpu_custom_call.1} parent=27 // pred_check
          %p156 = pneg %p33
        $region30: #{tpu_custom_call.1} parent=27 // pred_check_branch
          %158 = sbr.rel (%p156) target = $region32
        $region31: #{tpu_custom_call.1} parent=27 // pred_region
          %p159 = scmp.lt.s32.totalorder %s13, 1
          %s160 = scalar_select %p159, %s13, 1
          %s161 = smul.addr %s160, 8
          %s162 = scalar_lea.vmem %s0, %s161
        $region32: #{tpu_custom_call.1} parent=27 // pred_fallthru
          _
      $region28: #{tpu_custom_call.1} parent=5 // pred_fallthru
        _
      %p163 = scmp.le.s32.totalorder 1, %s13
      %p164 = scmp.lt.s32.totalorder %s13, 3
      %p165 = pnand %p163, %p164
      %p166 = pneg %p165
      // Predicated region
      $region33: #{tpu_custom_call.1} parent=5 // pred_check
        _
      $region34: #{tpu_custom_call.1} parent=5 // pred_check_branch
        %168 = sbr.rel (%p165) target = $region36
      $region35: #{tpu_custom_call.1} parent=5 // pred_region
        %s169 = ssub.s32 %s13, 1
        %p170 = scmp.lt.s32.totalorder %s18, 1
        %s171 = scalar_select %p170, %s18, 1
        %s172 = smul.addr %s171, 8
        %s173 = scalar_lea.vmem %s0, %s172
        %p174 = pneg %p39
        %p175 = pneg %p36
        %p176 = pneg %p60
        %p177 = pneg %p57
        %p178 = pneg %p81
        %p179 = pneg %p78
        %p180 = pneg %p102
        %p181 = pneg %p99
        %p182 = pneg %p128
        %p183 = pneg %p125
        %s184 = sand.u32 %s115, 1
        %s185 = scalar_lea.sflag [#allocation6], %s184
        %s186 = sand.u32 %s115, 1
        %s187 = smul.addr %s186, 8
        %s188 = scalar_lea.vmem [#allocation5], %s187
        %p189 = scmp.lt.s32.totalorder %s18, 1
        %s190 = scalar_select %p189, %s18, 1
        %s191 = smul.addr %s190, 8
        %s192 = scalar_lea.vmem %s0, %s191
        %v193 = vld [vmem:[%s192] sm:$0xff]
        %v194 = vld [vmem:[%s1 + $0x8] sm:$0xff]
        %v195 = vld [vmem:[%s1 + $0x18] sm:$0xff]
        %v196 = vld [vmem:[%s1 + $0x28] sm:$0xff]
        %v197 = vld [vmem:[%s1 + $0x38] sm:$0xff]
        %202 = vrot.lane.b32.xlu0 %v194, 64
        %v203 = vpop.permute.xlu0 %202
        %204 = vrot.lane.b32.xlu0 %v195, 64
        %v205 = vpop.permute.xlu0 %204
        %206 = vrot.lane.b32.xlu0 %v196, 64
        %v207 = vpop.permute.xlu0 %206
        %208 = vrot.lane.b32.xlu0 %v197, 64
        %v209 = vpop.permute.xlu0 %208
        %vm210 = vcmask 64512
        %v211 = vsel %vm210, %v203, 0
        %v213 = vsel %vm210, %v205, 0
        %v215 = vsel %vm210, %v207, 0
        %v217 = vsel %vm210, %v209, 0
        %219 = vmatpush.msra.mxu0 0.0
        %220 = vmatpush.msra.mxu0 0.0
        %221 = vmatpush.msra.mxu0 0.0
        %222 = vmatpush.msra.mxu0 0.0
        %223 = vmatpush.msra.mxu0 0.0
        %224 = vmatpush.msra.mxu0 0.0
        %225 = vmatpush.msra.mxu0 0.0
        %226 = vmatpush.msra.mxu0 0.0
        %227 = vmatpush.msra.mxu0 0.0
        %228 = vmatpush.msra.mxu0 0.0
        %229 = vmatpush.msra.mxu0 0.0
        %230 = vmatpush.msra.mxu0 0.0
        %231 = vmatpush.msra.mxu0 0.0
        %232 = vmatpush.msra.mxu0 0.0
        %233 = vmatpush.msra.mxu0 0.0
        %234 = vmatpush.msra.mxu0 %v193
        %235 = vmatmul.f32.gmra.mxu0 %v211
        %v236 = vpop.f32.mrf.mxu0
        %v237 = vadd.f32 0.0, %v236
        %238 = vmatmul.f32.gmra.mxu0 %v213
        %v239 = vpop.f32.mrf.mxu0
        %v240 = vadd.f32 0.0, %v239
        %241 = vmatmul.f32.gmra.mxu0 %v215
        %v242 = vpop.f32.mrf.mxu0
        %v243 = vadd.f32 0.0, %v242
        %244 = vmatmul.f32.gmra.mxu0 %v217
        %v245 = vpop.f32.mrf.mxu0
        %v246 = vadd.f32 0.0, %v245
        %247 = vdwg.mxu0
        %v248 = vld [vmem:[%s1] sm:$0xff]
        %v249 = vld [vmem:[%s1 + $0x10] sm:$0xff]
        %v250 = vld [vmem:[%s1 + $0x20] sm:$0xff]
        %v251 = vld [vmem:[%s1 + $0x30] sm:$0xff]
        %v252 = vmul.f32 %v237, %v248
        %v253 = vmul.f32 %v240, %v249
        %v254 = vmul.f32 %v243, %v250
        %v255 = vmul.f32 %v246, %v251
        %vm256 = vcmask 261120
        %257 = vst.msk [vmem:[#allocation2] sm:$0xff] %vm256, %v252
        %258 = vst.msk [vmem:[#allocation2 + $0x8] sm:$0xff] %vm256, %v253
        %259 = vst.msk [vmem:[#allocation2 + $0x10] sm:$0xff] %vm256, %v254
        %260 = vst.msk [vmem:[#allocation2 + $0x18] sm:$0xff] %vm256, %v255
        %v261 = vld [vmem:[%s1] sm:$0xff]
        %v262 = vld [vmem:[%s1 + $0x10] sm:$0xff]
        %v263 = vld [vmem:[%s1 + $0x20] sm:$0xff]
        %v264 = vld [vmem:[%s1 + $0x30] sm:$0xff]
        %269 = vrot.lane.b32.xlu0 %v261, 96
        %v270 = vpop.permute.xlu0 %269
        %271 = vrot.lane.b32.xlu0 %v262, 96
        %v272 = vpop.permute.xlu0 %271
        %273 = vrot.lane.b32.xlu0 %v263, 96
        %v274 = vpop.permute.xlu0 %273
        %275 = vrot.lane.b32.xlu0 %v264, 96
        %v276 = vpop.permute.xlu0 %275
        %v281 = vmul.f32 %v237, %v270
        %v282 = vmul.f32 %v240, %v272
        %v283 = vmul.f32 %v243, %v274
        %v284 = vmul.f32 %v246, %v276
        %289 = vrot.lane.b32.xlu0 %v281, 32
        %v290 = vpop.permute.xlu0 %289
        %291 = vrot.lane.b32.xlu0 %v282, 32
        %v292 = vpop.permute.xlu0 %291
        %293 = vrot.lane.b32.xlu0 %v283, 32
        %v294 = vpop.permute.xlu0 %293
        %295 = vrot.lane.b32.xlu0 %v284, 32
        %v296 = vpop.permute.xlu0 %295
        %vm301 = vcmask 523520
        %302 = vst.msk [vmem:[#allocation2] sm:$0xff] %vm301, %v290
        %303 = vst.msk [vmem:[#allocation2 + $0x8] sm:$0xff] %vm301, %v292
        %304 = vst.msk [vmem:[#allocation2 + $0x10] sm:$0xff] %vm301, %v294
        %305 = vst.msk [vmem:[#allocation2 + $0x18] sm:$0xff] %vm301, %v296
        %v306 = vld [vmem:[%s1] sm:$0xff]
        %v307 = vld [vmem:[%s1 + $0x10] sm:$0xff]
        %v308 = vld [vmem:[%s1 + $0x20] sm:$0xff]
        %v309 = vld [vmem:[%s1 + $0x30] sm:$0xff]
        %314 = vrot.lane.b32.xlu0 %v306, 64
        %v315 = vpop.permute.xlu0 %314
        %316 = vrot.lane.b32.xlu0 %v307, 64
        %v317 = vpop.permute.xlu0 %316
        %318 = vrot.lane.b32.xlu0 %v308, 64
        %v319 = vpop.permute.xlu0 %318
        %320 = vrot.lane.b32.xlu0 %v309, 64
        %v321 = vpop.permute.xlu0 %320
        %v326 = vmul.f32 %v237, %v315
        %v327 = vmul.f32 %v240, %v317
        %v328 = vmul.f32 %v243, %v319
        %v329 = vmul.f32 %v246, %v321
        %334 = vrot.lane.b32.xlu0 %v326, 64
        %v335 = vpop.permute.xlu0 %334
        %336 = vrot.lane.b32.xlu0 %v327, 64
        %v337 = vpop.permute.xlu0 %336
        %338 = vrot.lane.b32.xlu0 %v328, 64
        %v339 = vpop.permute.xlu0 %338
        %340 = vrot.lane.b32.xlu0 %v329, 64
        %v341 = vpop.permute.xlu0 %340
        %vm346 = vcmask 785920
        %347 = vst.msk [vmem:[#allocation2] sm:$0xff] %vm346, %v335
        %348 = vst.msk [vmem:[#allocation2 + $0x8] sm:$0xff] %vm346, %v337
        %349 = vst.msk [vmem:[#allocation2 + $0x10] sm:$0xff] %vm346, %v339
        %350 = vst.msk [vmem:[#allocation2 + $0x18] sm:$0xff] %vm346, %v341
        %v351 = vld [vmem:[%s1] sm:$0xff]
        %v352 = vld [vmem:[%s1 + $0x10] sm:$0xff]
        %v353 = vld [vmem:[%s1 + $0x20] sm:$0xff]
        %v354 = vld [vmem:[%s1 + $0x30] sm:$0xff]
        %359 = vrot.lane.b32.xlu0 %v351, 32
        %v360 = vpop.permute.xlu0 %359
        %361 = vrot.lane.b32.xlu0 %v352, 32
        %v362 = vpop.permute.xlu0 %361
        %363 = vrot.lane.b32.xlu0 %v353, 32
        %v364 = vpop.permute.xlu0 %363
        %365 = vrot.lane.b32.xlu0 %v354, 32
        %v366 = vpop.permute.xlu0 %365
        %v371 = vmul.f32 %v237, %v360
        %v372 = vmul.f32 %v240, %v362
        %v373 = vmul.f32 %v243, %v364
        %v374 = vmul.f32 %v246, %v366
        %379 = vrot.lane.b32.xlu0 %v371, 96
        %v380 = vpop.permute.xlu0 %379
        %381 = vrot.lane.b32.xlu0 %v372, 96
        %v382 = vpop.permute.xlu0 %381
        %383 = vrot.lane.b32.xlu0 %v373, 96
        %v384 = vpop.permute.xlu0 %383
        %385 = vrot.lane.b32.xlu0 %v374, 96
        %v386 = vpop.permute.xlu0 %385
        %vm391 = vcmask 1048320
        %392 = vst.msk [vmem:[#allocation2] sm:$0xff] %vm391, %v380
        %393 = vst.msk [vmem:[#allocation2 + $0x8] sm:$0xff] %vm391, %v382
        %394 = vst.msk [vmem:[#allocation2 + $0x10] sm:$0xff] %vm391, %v384
        %395 = vst.msk [vmem:[#allocation2 + $0x18] sm:$0xff] %vm391, %v386
        %v396 = vld [vmem:[#allocation2] sm:$0xff]
        %v397 = vld [vmem:[#allocation2 + $0x8] sm:$0xff]
        %v398 = vld [vmem:[#allocation2 + $0x10] sm:$0xff]
        %v399 = vld [vmem:[#allocation2 + $0x18] sm:$0xff]
        %v400 = vld [vmem:[%s2] sm:$0xff]
        %v401 = vld [vmem:[%s2 + $0x8] sm:$0xff]
        %v402 = vld [vmem:[%s2 + $0x10] sm:$0xff]
        %v403 = vld [vmem:[%s2 + $0x18] sm:$0xff]
        %v404 = vld [vmem:[%s2 + $0x20] sm:$0xff]
        %v405 = vld [vmem:[%s2 + $0x28] sm:$0xff]
        %v406 = vld [vmem:[%s2 + $0x30] sm:$0xff]
        %v407 = vld [vmem:[%s2 + $0x38] sm:$0xff]
        %v408 = vld [vmem:[%s2 + $0x40] sm:$0xff]
        %v409 = vld [vmem:[%s2 + $0x48] sm:$0xff]
        %v410 = vld [vmem:[%s2 + $0x50] sm:$0xff]
        %v411 = vld [vmem:[%s2 + $0x58] sm:$0xff]
        %v412 = vld [vmem:[%s2 + $0x60] sm:$0xff]
        %v413 = vld [vmem:[%s2 + $0x68] sm:$0xff]
        %v414 = vld [vmem:[%s2 + $0x70] sm:$0xff]
        %v415 = vld [vmem:[%s2 + $0x78] sm:$0xff]
        %416 = vmatpush.msra.mxu0 %v415
        %417 = vmatpush.msra.mxu0 %v414
        %418 = vmatpush.msra.mxu0 %v413
        %419 = vmatpush.msra.mxu0 %v412
        %420 = vmatpush.msra.mxu0 %v411
        %421 = vmatpush.msra.mxu0 %v410
        %422 = vmatpush.msra.mxu0 %v409
        %423 = vmatpush.msra.mxu0 %v408
        %424 = vmatpush.msra.mxu0 %v407
        %425 = vmatpush.msra.mxu0 %v406
        %426 = vmatpush.msra.mxu0 %v405
        %427 = vmatpush.msra.mxu0 %v404
        %428 = vmatpush.msra.mxu0 %v403
        %429 = vmatpush.msra.mxu0 %v402
        %430 = vmatpush.msra.mxu0 %v401
        %431 = vmatpush.msra.mxu0 %v400
        %432 = vmatmul.f32.gmra.mxu0 %v396
        %v433 = vpop.f32.mrf.mxu0
        %v434 = vadd.f32 0.0, %v433
        %435 = vmatmul.f32.gmra.mxu0 %v397
        %v436 = vpop.f32.mrf.mxu0
        %v437 = vadd.f32 0.0, %v436
        %438 = vmatmul.f32.gmra.mxu0 %v398
        %v439 = vpop.f32.mrf.mxu0
        %v440 = vadd.f32 0.0, %v439
        %441 = vmatmul.f32.gmra.mxu0 %v399
        %v442 = vpop.f32.mrf.mxu0
        %v443 = vadd.f32 0.0, %v442
        %444 = vdwg.mxu0
        %vm445 = vcmask 195584
        %446 = vst.msk [vmem:[#allocation3] sm:$0xff] %vm445, %v434
        %447 = vst.msk [vmem:[#allocation3 + $0x8] sm:$0xff] %vm445, %v437
        %448 = vst.msk [vmem:[#allocation3 + $0x10] sm:$0xff] %vm445, %v440
        %449 = vst.msk [vmem:[#allocation3 + $0x18] sm:$0xff] %vm445, %v443
        %v450 = vld [vmem:[#allocation3] sm:$0xff]
        %v451 = vld [vmem:[#allocation3 + $0x8] sm:$0xff]
        %v452 = vld [vmem:[#allocation3 + $0x10] sm:$0xff]
        %v453 = vld [vmem:[#allocation3 + $0x18] sm:$0xff]
        %458 = vrot.lane.b32.xlu0 %v450, 120
        %v459 = vpop.permute.xlu0 %458
        %460 = vrot.lane.b32.xlu0 %v451, 120
        %v461 = vpop.permute.xlu0 %460
        %462 = vrot.lane.b32.xlu0 %v452, 120
        %v463 = vpop.permute.xlu0 %462
        %464 = vrot.lane.b32.xlu0 %v453, 120
        %v465 = vpop.permute.xlu0 %464
        %v466 = vsel %vm210, %v450, 0
        %v468 = vsel %vm210, %v451, 0
        %v470 = vsel %vm210, %v452, 0
        %v472 = vsel %vm210, %v453, 0
        %v474 = vsel %vm210, %v459, 0
        %v476 = vsel %vm210, %v461, 0
        %v478 = vsel %vm210, %v463, 0
        %v480 = vsel %vm210, %v465, 0
        %482 = vmatpush.xpose.msra.mxu0 0.0
        %483 = vmatpush.xpose.msra.mxu0 0.0
        %484 = vmatpush.xpose.msra.mxu0 0.0
        %485 = vmatpush.xpose.msra.mxu0 0.0
        %486 = vmatpush.xpose.msra.mxu0 0.0
        %487 = vmatpush.xpose.msra.mxu0 0.0
        %488 = vmatpush.xpose.msra.mxu0 0.0
        %489 = vmatpush.xpose.msra.mxu0 0.0
        %490 = vmatpush.xpose.msra.mxu0 0.0
        %491 = vmatpush.xpose.msra.mxu0 0.0
        %492 = vmatpush.xpose.msra.mxu0 0.0
        %493 = vmatpush.xpose.msra.mxu0 0.0
        %494 = vmatpush.xpose.msra.mxu0 %v480
        %495 = vmatpush.xpose.msra.mxu0 %v478
        %496 = vmatpush.xpose.msra.mxu0 %v476
        %497 = vmatpush.xpose.msra.mxu0 %v474
        %498 = vmatmul.f32.gmra.mxu0 %v466
        %v499 = vpop.f32.mrf.mxu0
        %v500 = vadd.f32 %v194, %v499
        %501 = vmatmul.f32.gmra.mxu0 %v468
        %v502 = vpop.f32.mrf.mxu0
        %v503 = vadd.f32 %v195, %v502
        %504 = vmatmul.f32.gmra.mxu0 %v470
        %v505 = vpop.f32.mrf.mxu0
        %v506 = vadd.f32 %v196, %v505
        %507 = vmatmul.f32.gmra.mxu0 %v472
        %v508 = vpop.f32.mrf.mxu0
        %v509 = vadd.f32 %v197, %v508
        %510 = vdwg.mxu0
        %v511 = vsel %vm256, %v500, -inf
        %512 = vmax.xlane.f32.xlu0 %v511
        %v513 = vpop.xlane.xlu0 %512
        %v514 = vsel %vm256, %v503, -inf
        %515 = vmax.xlane.f32.xlu0 %v514
        %v516 = vpop.xlane.xlu0 %515
        %v517 = vsel %vm256, %v506, -inf
        %518 = vmax.xlane.f32.xlu0 %v517
        %v519 = vpop.xlane.xlu0 %518
        %v520 = vsel %vm256, %v509, -inf
        %521 = vmax.xlane.f32.xlu0 %v520
        %v522 = vpop.xlane.xlu0 %521
        %v523 = vsub.f32 %v500, %v513
        %v524 = vsub.f32 %v503, %v516
        %v525 = vsub.f32 %v506, %v519
        %v526 = vsub.f32 %v509, %v522
        %v527 = vmul.f32 %v523, 1.442695
        %v528 = vpow.pop %v527
        %v529 = vmul.f32 %v524, 1.442695
        %v530 = vpow.pop %v529
        %v531 = vmul.f32 %v525, 1.442695
        %v532 = vpow.pop %v531
        %v533 = vmul.f32 %v526, 1.442695
        %v534 = vpow.pop %v533
        %v535 = vsel %vm256, %v528, 0.0
        %536 = vadd.xlane.f32.xlu0 %v535
        %v537 = vpop.xlane.xlu0 %536
        %v538 = vsel %vm256, %v530, 0.0
        %539 = vadd.xlane.f32.xlu0 %v538
        %v540 = vpop.xlane.xlu0 %539
        %v541 = vsel %vm256, %v532, 0.0
        %542 = vadd.xlane.f32.xlu0 %v541
        %v543 = vpop.xlane.xlu0 %542
        %v544 = vsel %vm256, %v534, 0.0
        %545 = vadd.xlane.f32.xlu0 %v544
        %v546 = vpop.xlane.xlu0 %545
        %v547 = vrcp.pop %v537
        %v548 = vrcp.pop %v540
        %v549 = vrcp.pop %v543
        %v550 = vrcp.pop %v546
        %v551 = vmul.f32 %v528, %v547
        %v552 = vmul.f32 %v530, %v548
        %v553 = vmul.f32 %v532, %v549
        %v554 = vmul.f32 %v534, %v550
        %555 = vrot.lane.b32.xlu0 %v450, 112
        %v556 = vpop.permute.xlu0 %555
        %557 = vrot.lane.b32.xlu0 %v451, 112
        %v558 = vpop.permute.xlu0 %557
        %559 = vrot.lane.b32.xlu0 %v452, 112
        %v560 = vpop.permute.xlu0 %559
        %561 = vrot.lane.b32.xlu0 %v453, 112
        %v562 = vpop.permute.xlu0 %561
        %v568 = vsel %vm256, %v551, 0
        %v571 = vsel %vm256, %v552, 0
        %v574 = vsel %vm256, %v553, 0
        %v577 = vsel %vm256, %v554, 0
        %579 = vmatpush.msra.mxu0 0.0
        %580 = vmatpush.msra.mxu0 0.0
        %581 = vmatpush.msra.mxu0 0.0
        %582 = vmatpush.msra.mxu0 0.0
        %583 = vmatpush.msra.mxu0 0.0
        %584 = vmatpush.msra.mxu0 0.0
        %585 = vmatpush.msra.mxu0 0.0
        %586 = vmatpush.msra.mxu0 0.0
        %587 = vmatpush.msra.mxu0 0.0
        %588 = vmatpush.msra.mxu0 0.0
        %589 = vmatpush.msra.mxu0 0.0
        %590 = vmatpush.msra.mxu0 0.0
        %591 = vmatpush.msra.mxu0 %v562
        %592 = vmatpush.msra.mxu0 %v560
        %593 = vmatpush.msra.mxu0 %v558
        %594 = vmatpush.msra.mxu0 %v556
        %595 = vmatmul.f32.gmra.mxu0 %v568
        %v596 = vpop.f32.mrf.mxu0
        %v597 = vadd.f32 0.0, %v596
        %598 = vmatmul.f32.gmra.mxu0 %v571
        %v599 = vpop.f32.mrf.mxu0
        %v600 = vadd.f32 0.0, %v599
        %601 = vmatmul.f32.gmra.mxu0 %v574
        %v602 = vpop.f32.mrf.mxu0
        %v603 = vadd.f32 0.0, %v602
        %604 = vmatmul.f32.gmra.mxu0 %v577
        %v605 = vpop.f32.mrf.mxu0
        %v606 = vadd.f32 0.0, %v605
        %607 = vdwg.mxu0
        %v608 = vld [vmem:[%s1 + $0x8] sm:$0xff]
        %v609 = vld [vmem:[%s1 + $0x18] sm:$0xff]
        %v610 = vld [vmem:[%s1 + $0x28] sm:$0xff]
        %v611 = vld [vmem:[%s1 + $0x38] sm:$0xff]
        %616 = vrot.lane.b32.xlu0 %v608, 96
        %v617 = vpop.permute.xlu0 %616
        %618 = vrot.lane.b32.xlu0 %v609, 96
        %v619 = vpop.permute.xlu0 %618
        %620 = vrot.lane.b32.xlu0 %v610, 96
        %v621 = vpop.permute.xlu0 %620
        %622 = vrot.lane.b32.xlu0 %v611, 96
        %v623 = vpop.permute.xlu0 %622
        %v628 = vmul.f32 %v597, %v617
        %v629 = vmul.f32 %v600, %v619
        %v630 = vmul.f32 %v603, %v621
        %v631 = vmul.f32 %v606, %v623
        %632 = vst.msk [vmem:[#allocation4] sm:$0xff] %vm210, %v628
        %633 = vst.msk [vmem:[#allocation4 + $0x8] sm:$0xff] %vm210, %v629
        %634 = vst.msk [vmem:[#allocation4 + $0x10] sm:$0xff] %vm210, %v630
        %635 = vst.msk [vmem:[#allocation4 + $0x18] sm:$0xff] %vm210, %v631
        %v636 = vld [vmem:[%s1 + $0x8] sm:$0xff]
        %v637 = vld [vmem:[%s1 + $0x18] sm:$0xff]
        %v638 = vld [vmem:[%s1 + $0x28] sm:$0xff]
        %v639 = vld [vmem:[%s1 + $0x38] sm:$0xff]
        %644 = vrot.lane.b32.xlu0 %v636, 88
        %v645 = vpop.permute.xlu0 %644
        %646 = vrot.lane.b32.xlu0 %v637, 88
        %v647 = vpop.permute.xlu0 %646
        %648 = vrot.lane.b32.xlu0 %v638, 88
        %v649 = vpop.permute.xlu0 %648
        %650 = vrot.lane.b32.xlu0 %v639, 88
        %v651 = vpop.permute.xlu0 %650
        %v656 = vmul.f32 %v597, %v645
        %v657 = vmul.f32 %v600, %v647
        %v658 = vmul.f32 %v603, %v649
        %v659 = vmul.f32 %v606, %v651
        %664 = vrot.lane.b32.xlu0 %v656, 8
        %v665 = vpop.permute.xlu0 %664
        %666 = vrot.lane.b32.xlu0 %v657, 8
        %v667 = vpop.permute.xlu0 %666
        %668 = vrot.lane.b32.xlu0 %v658, 8
        %v669 = vpop.permute.xlu0 %668
        %670 = vrot.lane.b32.xlu0 %v659, 8
        %v671 = vpop.permute.xlu0 %670
        %vm676 = vcmask 130112
        %677 = vst.msk [vmem:[#allocation4] sm:$0xff] %vm676, %v665
        %678 = vst.msk [vmem:[#allocation4 + $0x8] sm:$0xff] %vm676, %v667
        %679 = vst.msk [vmem:[#allocation4 + $0x10] sm:$0xff] %vm676, %v669
        %680 = vst.msk [vmem:[#allocation4 + $0x18] sm:$0xff] %vm676, %v671
        %v681 = vld [vmem:[%s1 + $0x8] sm:$0xff]
        %v682 = vld [vmem:[%s1 + $0x18] sm:$0xff]
        %v683 = vld [vmem:[%s1 + $0x28] sm:$0xff]
        %v684 = vld [vmem:[%s1 + $0x38] sm:$0xff]
        %689 = vrot.lane.b32.xlu0 %v681, 80
        %v690 = vpop.permute.xlu0 %689
        %691 = vrot.lane.b32.xlu0 %v682, 80
        %v692 = vpop.permute.xlu0 %691
        %693 = vrot.lane.b32.xlu0 %v683, 80
        %v694 = vpop.permute.xlu0 %693
        %695 = vrot.lane.b32.xlu0 %v684, 80
        %v696 = vpop.permute.xlu0 %695
        %v701 = vmul.f32 %v597, %v690
        %v702 = vmul.f32 %v600, %v692
        %v703 = vmul.f32 %v603, %v694
        %v704 = vmul.f32 %v606, %v696
        %709 = vrot.lane.b32.xlu0 %v701, 16
        %v710 = vpop.permute.xlu0 %709
        %711 = vrot.lane.b32.xlu0 %v702, 16
        %v712 = vpop.permute.xlu0 %711
        %713 = vrot.lane.b32.xlu0 %v703, 16
        %v714 = vpop.permute.xlu0 %713
        %715 = vrot.lane.b32.xlu0 %v704, 16
        %v716 = vpop.permute.xlu0 %715
        %vm721 = vcmask 195712
        %722 = vst.msk [vmem:[#allocation4] sm:$0xff] %vm721, %v710
        %723 = vst.msk [vmem:[#allocation4 + $0x8] sm:$0xff] %vm721, %v712
        %724 = vst.msk [vmem:[#allocation4 + $0x10] sm:$0xff] %vm721, %v714
        %725 = vst.msk [vmem:[#allocation4 + $0x18] sm:$0xff] %vm721, %v716
        %v726 = vld [vmem:[%s1 + $0x8] sm:$0xff]
        %v727 = vld [vmem:[%s1 + $0x18] sm:$0xff]
        %v728 = vld [vmem:[%s1 + $0x28] sm:$0xff]
        %v729 = vld [vmem:[%s1 + $0x38] sm:$0xff]
        %734 = vrot.lane.b32.xlu0 %v726, 72
        %v735 = vpop.permute.xlu0 %734
        %736 = vrot.lane.b32.xlu0 %v727, 72
        %v737 = vpop.permute.xlu0 %736
        %738 = vrot.lane.b32.xlu0 %v728, 72
        %v739 = vpop.permute.xlu0 %738
        %740 = vrot.lane.b32.xlu0 %v729, 72
        %v741 = vpop.permute.xlu0 %740
        %v746 = vmul.f32 %v597, %v735
        %v747 = vmul.f32 %v600, %v737
        %v748 = vmul.f32 %v603, %v739
        %v749 = vmul.f32 %v606, %v741
        %754 = vrot.lane.b32.xlu0 %v746, 24
        %v755 = vpop.permute.xlu0 %754
        %756 = vrot.lane.b32.xlu0 %v747, 24
        %v757 = vpop.permute.xlu0 %756
        %758 = vrot.lane.b32.xlu0 %v748, 24
        %v759 = vpop.permute.xlu0 %758
        %760 = vrot.lane.b32.xlu0 %v749, 24
        %v761 = vpop.permute.xlu0 %760
        %vm766 = vcmask 261312
        %767 = vst.msk [vmem:[#allocation4] sm:$0xff] %vm766, %v755
        %768 = vst.msk [vmem:[#allocation4 + $0x8] sm:$0xff] %vm766, %v757
        %769 = vst.msk [vmem:[#allocation4 + $0x10] sm:$0xff] %vm766, %v759
        %770 = vst.msk [vmem:[#allocation4 + $0x18] sm:$0xff] %vm766, %v761
        %v771 = vld [vmem:[#allocation4] sm:$0xff]
        %v772 = vld [vmem:[#allocation4 + $0x8] sm:$0xff]
        %v773 = vld [vmem:[#allocation4 + $0x10] sm:$0xff]
        %v774 = vld [vmem:[#allocation4 + $0x18] sm:$0xff]
        %775 = vrot.lane.b32.xlu0 %v194, 56
        %v776 = vpop.permute.xlu0 %775
        %v777 = vsel %vm256, %v776, 0
        %779 = vmatpush.msra.mxu0 0.0
        %780 = vmatpush.msra.mxu0 0.0
        %781 = vmatpush.msra.mxu0 0.0
        %782 = vmatpush.msra.mxu0 0.0
        %783 = vmatpush.msra.mxu0 0.0
        %784 = vmatpush.msra.mxu0 0.0
        %785 = vmatpush.msra.mxu0 0.0
        %786 = vmatpush.msra.mxu0 0.0
        %787 = vmatpush.msra.mxu0 0.0
        %788 = vmatpush.msra.mxu0 0.0
        %789 = vmatpush.msra.mxu0 0.0
        %790 = vmatpush.msra.mxu0 0.0
        %791 = vmatpush.msra.mxu0 %v774
        %792 = vmatpush.msra.mxu0 %v773
        %793 = vmatpush.msra.mxu0 %v772
        %794 = vmatpush.msra.mxu0 %v771
        %795 = vmatmul.f32.gmra.mxu0 %v777
        %v796 = vpop.f32.mrf.mxu0
        %v797 = vadd.f32 0.0, %v796
        %798 = vdwg.mxu0
        %v799 = vld [vmem:[%s3] sm:$0xff]
        %v800 = vld [vmem:[%s3 + $0x8] sm:$0xff]
        %v801 = vld [vmem:[%s3 + $0x10] sm:$0xff]
        %v802 = vld [vmem:[%s3 + $0x18] sm:$0xff]
        %v803 = vld [vmem:[%s3 + $0x20] sm:$0x1]
        %v804 = vld [vmem:[%s3 + $0x21] sm:$0x1]
        %v805 = vld [vmem:[%s3 + $0x22] sm:$0x1]
        %v806 = vld [vmem:[%s3 + $0x23] sm:$0x1]
        %v808 = vsel %vm256, %v797, 0
        %810 = vmatpush.msra.mxu0 0.0
        %811 = vmatpush.msra.mxu0 0.0
        %812 = vmatpush.msra.mxu0 0.0
        %813 = vmatpush.msra.mxu0 0.0
        %814 = vmatpush.msra.mxu0 0.0
        %815 = vmatpush.msra.mxu0 0.0
        %816 = vmatpush.msra.mxu0 0.0
        %817 = vmatpush.msra.mxu0 0.0
        %818 = vmatpush.msra.mxu0 0.0
        %819 = vmatpush.msra.mxu0 0.0
        %820 = vmatpush.msra.mxu0 0.0
        %821 = vmatpush.msra.mxu0 0.0
        %822 = vmatpush.msra.mxu0 %v802
        %823 = vmatpush.msra.mxu0 %v801
        %824 = vmatpush.msra.mxu0 %v800
        %825 = vmatpush.msra.mxu0 %v799
        %826 = vmatmul.f32.gmra.mxu0 %v808
        %v827 = vpop.f32.mrf.mxu0
        %v828 = vadd.f32 %v193, %v827
        %829 = vdwg.mxu0
        %v830 = vsel %vm256, %v828, 0.0
        %831 = vadd.xlane.f32.xlu0 %v830
        %v832 = vpop.xlane.xlu0 %831
        %v833 = vrcp.pop 32.0
        %v834 = vmul.f32 32.0, %v833
        %v835 = vsub.f32 1.0, %v834
        %v836 = vmul.f32 %v833, %v835
        %v837 = vadd.f32 %v833, %v836
        %vm838 = vweird.f32 %v833
        %v839 = vsel %vm838, %v833, %v837
        %v840 = vmul.f32 %v832, %v839
        %v841 = vsub.f32 %v828, %v840
        %v842 = vmul.f32 %v841, %v841
        %v843 = vsel %vm256, %v842, 0.0
        %844 = vadd.xlane.f32.xlu0 %v843
        %v845 = vpop.xlane.xlu0 %844
        %v846 = vmul.f32 %v845, %v839
        %v847 = vadd.f32 %v846, 1e-05
        %v848 = vrsqrt.pop %v847
        %v849 = vmul.f32 %v848, %v847
        %v850 = vmul.f32 %v849, %v848
        %v851 = vmul.f32 0.5, %v850
        %v852 = vsub.f32 1.5, %v851
        %v853 = vmul.f32 %v848, %v852
        %vm854 = vweird.f32 %v847
        %vm855 = vweird.f32 %v848
        %vm856 = vmor %vm854, %vm855
        %v857 = vsel %vm856, %v848, %v853
        %v858 = vmul.f32 %v841, %v857
        %v859 = vperm.slane %v803, 0
        %v860 = vmul.f32 %v858, %v859
        %v861 = vperm.slane %v804, 0
        %v862 = vadd.f32 %v860, %v861
        %v863 = vld [vmem:[%s3] sm:$0xff]
        %v864 = vld [vmem:[%s3 + $0x8] sm:$0xff]
        %v865 = vld [vmem:[%s3 + $0x10] sm:$0xff]
        %v866 = vld [vmem:[%s3 + $0x18] sm:$0xff]
        %v867 = vld [vmem:[%s3 + $0x20] sm:$0xff]
        %v868 = vld [vmem:[%s3 + $0x28] sm:$0xff]
        %v869 = vld [vmem:[%s3 + $0x30] sm:$0xff]
        %v870 = vld [vmem:[%s3 + $0x38] sm:$0xff]
        %875 = vrot.lane.b32.xlu0 %v799, 96
        %v876 = vpop.permute.xlu0 %875
        %877 = vrot.lane.b32.xlu0 %v800, 96
        %v878 = vpop.permute.xlu0 %877
        %879 = vrot.lane.b32.xlu0 %v801, 96
        %v880 = vpop.permute.xlu0 %879
        %881 = vrot.lane.b32.xlu0 %v802, 96
        %v882 = vpop.permute.xlu0 %881
        %v888 = vsel %vm256, %v862, 0
        %890 = vmatpush.msra.mxu0 0.0
        %891 = vmatpush.msra.mxu0 0.0
        %892 = vmatpush.msra.mxu0 0.0
        %893 = vmatpush.msra.mxu0 0.0
        %894 = vmatpush.msra.mxu0 0.0
        %895 = vmatpush.msra.mxu0 0.0
        %896 = vmatpush.msra.mxu0 0.0
        %897 = vmatpush.msra.mxu0 0.0
        %898 = vmatpush.msra.mxu0 0.0
        %899 = vmatpush.msra.mxu0 0.0
        %900 = vmatpush.msra.mxu0 0.0
        %901 = vmatpush.msra.mxu0 0.0
        %902 = vmatpush.msra.mxu0 %v882
        %903 = vmatpush.msra.mxu0 %v880
        %904 = vmatpush.msra.mxu0 %v878
        %905 = vmatpush.msra.mxu0 %v876
        %906 = vmatmul.f32.gmra.mxu0 %v888
        %v907 = vpop.f32.mrf.mxu0
        %v908 = vadd.f32 0.0, %v907
        %909 = vdwg.mxu0
        %v910 = vmax.f32 %v908, 0.0
        %919 = vrot.lane.b32.xlu0 %v863, 32
        %v920 = vpop.permute.xlu0 %919
        %921 = vrot.lane.b32.xlu0 %v864, 32
        %v922 = vpop.permute.xlu0 %921
        %923 = vrot.lane.b32.xlu0 %v865, 32
        %v924 = vpop.permute.xlu0 %923
        %925 = vrot.lane.b32.xlu0 %v866, 32
        %v926 = vpop.permute.xlu0 %925
        %927 = vrot.lane.b32.xlu0 %v867, 32
        %v928 = vpop.permute.xlu0 %927
        %929 = vrot.lane.b32.xlu0 %v868, 32
        %v930 = vpop.permute.xlu0 %929
        %931 = vrot.lane.b32.xlu0 %v869, 32
        %v932 = vpop.permute.xlu0 %931
        %933 = vrot.lane.b32.xlu0 %v870, 32
        %v934 = vpop.permute.xlu0 %933
        %vm943 = vcmask 523264
        %v945 = vsel %vm943, %v910, 0
        %947 = vmatpush.msra.mxu0 0.0
        %948 = vmatpush.msra.mxu0 0.0
        %949 = vmatpush.msra.mxu0 0.0
        %950 = vmatpush.msra.mxu0 0.0
        %951 = vmatpush.msra.mxu0 0.0
        %952 = vmatpush.msra.mxu0 0.0
        %953 = vmatpush.msra.mxu0 0.0
        %954 = vmatpush.msra.mxu0 0.0
        %955 = vmatpush.msra.mxu0 %v934
        %956 = vmatpush.msra.mxu0 %v932
        %957 = vmatpush.msra.mxu0 %v930
        %958 = vmatpush.msra.mxu0 %v928
        %959 = vmatpush.msra.mxu0 %v926
        %960 = vmatpush.msra.mxu0 %v924
        %961 = vmatpush.msra.mxu0 %v922
        %962 = vmatpush.msra.mxu0 %v920
        %963 = vmatmul.f32.gmra.mxu0 %v945
        %v964 = vpop.f32.mrf.mxu0
        %v965 = vadd.f32 %v862, %v964
        %966 = vdwg.mxu0
        %v967 = vsel %vm256, %v965, 0.0
        %968 = vadd.xlane.f32.xlu0 %v967
        %v969 = vpop.xlane.xlu0 %968
        %v970 = vmul.f32 %v969, %v839
        %v971 = vsub.f32 %v965, %v970
        %v972 = vmul.f32 %v971, %v971
        %v973 = vsel %vm256, %v972, 0.0
        %974 = vadd.xlane.f32.xlu0 %v973
        %v975 = vpop.xlane.xlu0 %974
        %v976 = vmul.f32 %v975, %v839
        %v977 = vadd.f32 %v976, 1e-05
        %v978 = vrsqrt.pop %v977
        %v979 = vmul.f32 %v978, %v977
        %v980 = vmul.f32 %v979, %v978
        %v981 = vmul.f32 0.5, %v980
        %v982 = vsub.f32 1.5, %v981
        %v983 = vmul.f32 %v978, %v982
        %vm984 = vweird.f32 %v977
        %vm985 = vweird.f32 %v978
        %vm986 = vmor %vm984, %vm985
        %v987 = vsel %vm986, %v978, %v983
        %v988 = vmul.f32 %v971, %v987
        %v989 = vperm.slane %v805, 0
        %v990 = vmul.f32 %v988, %v989
        %v991 = vperm.slane %v806, 0
        %v992 = vadd.f32 %v990, %v991
        %993 = vst.msk [vmem:[%s188] sm:$0xff] %vm256, %v992
        %s994 = sand.u32 %s115, 1
        %s995 = scalar_lea.sflag [#allocation6], %s994
        %s996 = sand.u32 %s115, 1
        %s997 = smul.addr %s996, 8
        %s998 = scalar_lea.vmem [#allocation5], %s997
        // Predicated region
        $region37: #{tpu_custom_call.1} parent=35 // pred_check
          %p999 = pneg %p125
        $region38: #{tpu_custom_call.1} parent=35 // pred_check_branch
          %1001 = sbr.rel (%p999) target = $region40
        $region39: #{tpu_custom_call.1} parent=35 // pred_region
          %1003 = vsyncadd %s995, 0
          %s1004 = smul.addr %s18, 8
          %s1005 = scalar_lea.hbm %s4, %s1004
          %s1007 = sshll.u32 %s998, 4
          %s1008 = int_to_ptr.vmem [resolvable:$true] %s1007
          %s1009 = sshll.u32 %s1005, 4
          %s1010 = int_to_ptr.hbm [resolvable:$true] %s1009
          %1012 = dma.vmem_to_hbm [thread:$0]  %s1008, 128, %s1010, %s995
        $region40: #{tpu_custom_call.1} parent=35 // pred_fallthru
          _
      $region36: #{tpu_custom_call.1} parent=5 // pred_fallthru
        _
      %p1013 = scmp.le.s32.totalorder 2, %s13
      // Predicated region
      $region41: #{tpu_custom_call.1} parent=5 // pred_check
        %p1014 = pneg %p1013
      $region42: #{tpu_custom_call.1} parent=5 // pred_check_branch
        %1016 = sbr.rel (%p1014) target = $region44
      $region43: #{tpu_custom_call.1} parent=5 // pred_region
        %s1017 = ssub.s32 %s13, 2
        // Predicated region
        $region45: #{tpu_custom_call.1} parent=43 // pred_check
          %p1018 = pneg %p131
        $region46: #{tpu_custom_call.1} parent=43 // pred_check_branch
          %1020 = sbr.rel (%p1018) target = $region48
        $region47: #{tpu_custom_call.1} parent=43 // pred_region
          %s1021 = sand.u32 %s116, 1
          %s1022 = scalar_lea.sflag [#allocation6], %s1021
          %s1023 = sand.u32 %s116, 1
          %s1024 = smul.addr %s1023, 8
          %s1025 = scalar_lea.vmem [#allocation5], %s1024
          %1027 = dma.done %s1022, 128
        $region48: #{tpu_custom_call.1} parent=43 // pred_fallthru
          _
      $region44: #{tpu_custom_call.1} parent=5 // pred_fallthru
        _
    $region6: #{tpu_custom_call.1} parent=1 // loop_footer
      %s17 = sadd.s32 1, %s13
    $region7: #{tpu_custom_call.1} parent=1 // loop_footer_branch
      %12 = sbr.rel target = $region3
    $region8: #{tpu_custom_call.1} parent=1 // loop_exit
      _
    %1028 = vsyncpa [#allocation6], 1
    %s1029 = scalar_lea.sflag [#allocation6], 1
    %1030 = vsyncpa %s1029, 1

</llo_original>
